<compile_context>
chip_gen: v6e
topology: v6e:2x2x1
jax: 0.10.0
libtpu: 0.0.40
codegen_flags: <defaults>
</compile_context>

<pallas_src>
import jax
import jax.numpy as jnp
from jax.experimental import pallas as pl
from jax.experimental.pallas import tpu as pltpu

FEATURE_DIM = 32
H1 = 64
H2 = 32

TILE_M_MAX = 2048          # packed rows per grid step (sweepable; fits v5e/v6e/v7x)
WEIGHT_DTYPE = jnp.bfloat16  # bf16 MXU inputs on all generations; f32 accumulate


# ----------------------------------------------------------------------------- kernel

def _mlp_kernel(x_ref, w1_ref, b1_ref, w2_ref, b2_ref, w3_ref, b3_ref, o_ref):
    # x block: (tile_m, pack*C), lane-dense.  Weights are block-diagonal packed
    # copies (kron(I_pack, W)), so one matmul processes `pack` feature rows.
    ep_dtype = b1_ref.dtype                      # bf16 epilogue on v6e/v7x, f32 on v5e
    x = x_ref[...].astype(w1_ref.dtype)

    # fc1 + ReLU  (MXU f32 accumulate, bias/ReLU in epilogue dtype)
    h1 = jnp.dot(x, w1_ref[...], preferred_element_type=jnp.float32)
    h1 = jnp.maximum(h1.astype(ep_dtype) + b1_ref[...], 0).astype(w2_ref.dtype)

    # fc2 + ReLU
    h2 = jnp.dot(h1, w2_ref[...], preferred_element_type=jnp.float32)
    h2 = jnp.maximum(h2.astype(ep_dtype) + b2_ref[...], 0).astype(w3_ref.dtype)

    # fc3 + sigmoid; sigmoid(x) = 0.5*tanh(0.5*x) + 0.5 -> single EUP op, exact.
    h3 = jnp.dot(h2, w3_ref[...], preferred_element_type=jnp.float32)
    h3 = h3 + b3_ref[...]
    out = 0.5 * jnp.tanh(0.5 * h3) + 0.5

    o_ref[...] = out.astype(o_ref.dtype)


# ----------------------------------------------------------------------------- packing

def _default_epilogue_dtype():
    """bf16 bias/ReLU epilogue on bf16-capable VPUs (v6e/v7x); f32 on v5e."""
    try:
        kind = jax.devices()[0].device_kind.lower()
    except Exception:
        kind = ""
    return jnp.float32 if "v5" in kind else jnp.bfloat16


def pack_params(params, feature_dim, *, weight_dtype=WEIGHT_DTYPE, epilogue_dtype=None):
    """Build lane-packed (block-diagonal) weights / tiled biases ONCE, outside jit."""
    C = feature_dim
    pack = 128 // C if (C <= 128 and 128 % C == 0) else 1
    if epilogue_dtype is None:
        epilogue_dtype = _default_epilogue_dtype()

    eye = jnp.eye(pack, dtype=jnp.float32)

    def pw(w):  # block_diag(w, ..., w) == kron(I_pack, w)
        return jnp.kron(eye, w.astype(jnp.float32)).astype(weight_dtype)

    def pb(b, dtype):
        return jnp.tile(b.reshape(1, -1), (1, pack)).astype(dtype)

    return {
        "w1": pw(params["w1"]), "b1": pb(params["b1"], epilogue_dtype),
        "w2": pw(params["w2"]), "b2": pb(params["b2"], epilogue_dtype),
        "w3": pw(params["w3"]), "b3": pb(params["b3"], jnp.float32),
    }


# ----------------------------------------------------------------------------- tiling

def _choose_tiling(m8, tile_max=TILE_M_MAX):
    """Pick (tile_m, m_pad): tile_m | m_pad, both multiples of 8, m_pad >= m8.

    Prefers a tile that divides the 8-rounded row count (-> no wrapper pad copy);
    only pads up to a tile_max multiple for awkward row counts.  Keeps >= 2 grid
    steps when there's enough work so v7x megacore engages both TensorCores.
    """
    if m8 <= tile_max:
        if m8 >= 1024 and m8 % 16 == 0:
            return m8 // 2, m8
        return m8, m8
    q = m8 // 8
    best_d = 1
    for d in range(tile_max // 8, 0, -1):
        if q % d == 0:
            best_d = d
            break
    tile_m = 8 * best_d
    if tile_m * 4 >= tile_max:        # big enough tile; no extra padding needed
        return tile_m, m8
    # Awkward row count: accept one minimal pad-to-tile copy instead of tiny tiles.
    m_pad = -(-m8 // tile_max) * tile_max
    return tile_max, m_pad


# ----------------------------------------------------------------------------- forward

def variance_confidence_nn(features, packed):
    """features: (B, T, C) float32; packed: output of pack_params()."""
    B, T, C = features.shape
    N = B * T

    pack = packed["w1"].shape[0] // C          # static from weight shape
    cl = pack * C

    m = -(-N // pack)                          # packed rows needed
    m8 = -(-m // 8) * 8                        # f32 sublane alignment
    tile_m, m_pad = _choose_tiling(m8)
    n_rows = m_pad * pack                      # feature rows after padding
    grid_m = m_pad // tile_m

    x = features.reshape(N, C)
    if n_rows != N:
        # Minimal pad (skipped entirely when N is already tile-aligned).
        x = jnp.pad(x, ((0, n_rows - N), (0, 0)))
    x = x.reshape(m_pad, cl)                   # free row-major view, 128-lane dense

    w1, b1 = packed["w1"], packed["b1"]
    w2, b2 = packed["w2"], packed["b2"]
    w3, b3 = packed["w3"], packed["b3"]

    const = lambda shape: pl.BlockSpec(shape, lambda i: (0, 0))  # resident across steps

    # Advisory cost estimate for XLA's scheduler (useful math only).
    flops = 2 * N * (C * H1 + H1 * H2 + H2 * C)
    wbytes = 2 * (w1.size + w2.size + w3.size) + 4 * (b1.size + b2.size + b3.size)
    cost = pl.CostEstimate(flops=int(flops), transcendentals=int(N * C),
                           bytes_accessed=int(8 * N * C + wbytes))

    out = pl.pallas_call(
        _mlp_kernel,
        out_shape=jax.ShapeDtypeStruct((m_pad, cl), features.dtype),
        grid_spec=pltpu.PrefetchScalarGridSpec(
            num_scalar_prefetch=0,
            grid=(grid_m,),
            in_specs=[
                pl.BlockSpec((tile_m, cl), lambda i: (i, 0)),
                const(w1.shape), const(b1.shape),
                const(w2.shape), const(b2.shape),
                const(w3.shape), const(b3.shape),
            ],
            out_specs=pl.BlockSpec((tile_m, cl), lambda i: (i, 0)),
        ),
        compiler_params=pltpu.CompilerParams(
            dimension_semantics=("parallel",)),   # megacore split on v7x
        cost_estimate=cost,
    )(x, w1, b1, w2, b2, w3, b3)

    out = out.reshape(n_rows, C)
    if n_rows != N:
        out = out[:N]
    return out.reshape(B, T, C)


# ----------------------------------------------------------------------------- params / reference

def init_params(feature_dim, key):
    """Deterministic parameter init matching nn.Linear shapes ((in, out) weights)."""
    ks = jax.random.split(key, 6)

    def linear(kw, kb, fan_in, fan_out):
        bound = 1.0 / jnp.sqrt(fan_in)
        w = jax.random.uniform(kw, (fan_in, fan_out), jnp.float32, -bound, bound)
        b = jax.random.uniform(kb, (1, fan_out), jnp.float32, -bound, bound)
        return w, b

    w1, b1 = linear(ks[0], ks[1], feature_dim, H1)
    w2, b2 = linear(ks[2], ks[3], H1, H2)
    w3, b3 = linear(ks[4], ks[5], H2, feature_dim)
    return {"w1": w1, "b1": b1, "w2": w2, "b2": b2, "w3": w3, "b3": b3}


def reference_forward(features, params):
    B, T, C = features.shape
    x = features.reshape(B * T, C)
    x = jnp.maximum(x @ params["w1"] + params["b1"], 0.0)
    x = jnp.maximum(x @ params["w2"] + params["b2"], 0.0)
    x = jax.nn.sigmoid(x @ params["w3"] + params["b3"])
    return x.reshape(B, T, C)


if __name__ == "__main__":
    key = jax.random.PRNGKey(0)
    k_feat, k_param = jax.random.split(key)

    B, T, C = 2, 8, FEATURE_DIM
    features = jax.random.normal(k_feat, (B, T, C), jnp.float32)
    params = init_params(C, k_param)

    # Packed weights are built once, outside the jitted forward.
    packed = pack_params(params, C)

    fwd = jax.jit(variance_confidence_nn)
    out = fwd(features, packed)
    out = jax.block_until_ready(out)

    ref = reference_forward(features, params)
    assert out.shape == (B, T, C)
    # Tolerance accounts for bf16 MXU inputs / bf16 epilogue (f32 accumulation).
    assert jnp.allclose(out, ref, atol=2e-2, rtol=2e-2), float(jnp.max(jnp.abs(out - ref)))

    print("KERNEL_OK")
</pallas_src>

<mosaic_0001>
module attributes {stable_mosaic.version = 11 : i64} {
  func.func @_mlp_kernel(%arg0: i32, %arg1: memref<8x128xf32, #tpu.memory_space<vmem>>, %arg2: memref<128x256xbf16, #tpu.memory_space<vmem>>, %arg3: memref<1x256xbf16, #tpu.memory_space<vmem>>, %arg4: memref<256x128xbf16, #tpu.memory_space<vmem>>, %arg5: memref<1x128xbf16, #tpu.memory_space<vmem>>, %arg6: memref<128x128xbf16, #tpu.memory_space<vmem>>, %arg7: memref<1x128xf32, #tpu.memory_space<vmem>>, %arg8: memref<8x128xf32, #tpu.memory_space<vmem>>) attributes {dimension_semantics = [#tpu.dimension_semantics<parallel>], iteration_bounds = array<i64: 1>, scalar_prefetch = 0 : i64, scratch_operands = 0 : i64, tpu.core_type = #tpu.core_type<tc>, window_params = [{transform_indices = @transform_0, window_bounds = array<i64: 8, 128>}, {pipeline_mode = #tpu.pipeline_mode<synchronous>, transform_indices = @transform_1, window_bounds = array<i64: 128, 256>}, {pipeline_mode = #tpu.pipeline_mode<synchronous>, transform_indices = @transform_2, window_bounds = array<i64: 1, 256>}, {pipeline_mode = #tpu.pipeline_mode<synchronous>, transform_indices = @transform_3, window_bounds = array<i64: 256, 128>}, {pipeline_mode = #tpu.pipeline_mode<synchronous>, transform_indices = @transform_4, window_bounds = array<i64: 1, 128>}, {pipeline_mode = #tpu.pipeline_mode<synchronous>, transform_indices = @transform_5, window_bounds = array<i64: 128, 128>}, {pipeline_mode = #tpu.pipeline_mode<synchronous>, transform_indices = @transform_6, window_bounds = array<i64: 1, 128>}, {transform_indices = @transform_7, window_bounds = array<i64: 8, 128>}]} {
    %c0 = arith.constant 0 : index
    %c0_0 = arith.constant 0 : index
    %0 = vector.load %arg1[%c0, %c0_0] : memref<8x128xf32, #tpu.memory_space<vmem>>, vector<8x128xf32>
    %1 = arith.truncf %0 : vector<8x128xf32> to vector<8x128xbf16>
    %c0_1 = arith.constant 0 : index
    %c0_2 = arith.constant 0 : index
    %2 = vector.load %arg2[%c0_1, %c0_2] : memref<128x256xbf16, #tpu.memory_space<vmem>>, vector<128x256xbf16>
    %cst = arith.constant dense<0.000000e+00> : vector<8x256xf32>
    %3 = tpu.matmul %1, %2, %cst {dimension_numbers = #tpu.dot_dimension_numbers<[1], [0], [0], [1], [0, 0, 1, 1], [], []>} : vector<8x128xbf16>, vector<128x256xbf16>, vector<8x256xf32> -> vector<8x256xf32>
    %4 = arith.truncf %3 : vector<8x256xf32> to vector<8x256xbf16>
    %c0_3 = arith.constant 0 : index
    %c0_4 = arith.constant 0 : index
    %5 = vector.load %arg3[%c0_3, %c0_4] : memref<1x256xbf16, #tpu.memory_space<vmem>>, vector<1x256xbf16>
    %6 = vector.broadcast %5 : vector<1x256xbf16> to vector<8x256xbf16>
    %7 = arith.addf %4, %6 : vector<8x256xbf16>
    %cst_5 = arith.constant 0.000000e+00 : bf16
    %8 = vector.broadcast %cst_5 : bf16 to vector<8x256xbf16>
    %9 = arith.maximumf %7, %8 : vector<8x256xbf16>
    %c0_6 = arith.constant 0 : index
    %c0_7 = arith.constant 0 : index
    %10 = vector.load %arg4[%c0_6, %c0_7] : memref<256x128xbf16, #tpu.memory_space<vmem>>, vector<256x128xbf16>
    %cst_8 = arith.constant dense<0.000000e+00> : vector<8x128xf32>
    %11 = tpu.matmul %9, %10, %cst_8 {dimension_numbers = #tpu.dot_dimension_numbers<[1], [0], [0], [1], [0, 0, 1, 1], [], []>} : vector<8x256xbf16>, vector<256x128xbf16>, vector<8x128xf32> -> vector<8x128xf32>
    %12 = arith.truncf %11 : vector<8x128xf32> to vector<8x128xbf16>
    %c0_9 = arith.constant 0 : index
    %c0_10 = arith.constant 0 : index
    %13 = vector.load %arg5[%c0_9, %c0_10] : memref<1x128xbf16, #tpu.memory_space<vmem>>, vector<1x128xbf16>
    %14 = vector.broadcast %13 : vector<1x128xbf16> to vector<8x128xbf16>
    %15 = arith.addf %12, %14 : vector<8x128xbf16>
    %cst_11 = arith.constant 0.000000e+00 : bf16
    %16 = vector.broadcast %cst_11 : bf16 to vector<8x128xbf16>
    %17 = arith.maximumf %15, %16 : vector<8x128xbf16>
    %c0_12 = arith.constant 0 : index
    %c0_13 = arith.constant 0 : index
    %18 = vector.load %arg6[%c0_12, %c0_13] : memref<128x128xbf16, #tpu.memory_space<vmem>>, vector<128x128xbf16>
    %cst_14 = arith.constant dense<0.000000e+00> : vector<8x128xf32>
    %19 = tpu.matmul %17, %18, %cst_14 {dimension_numbers = #tpu.dot_dimension_numbers<[1], [0], [0], [1], [0, 0, 1, 1], [], []>} : vector<8x128xbf16>, vector<128x128xbf16>, vector<8x128xf32> -> vector<8x128xf32>
    %c0_15 = arith.constant 0 : index
    %c0_16 = arith.constant 0 : index
    %20 = vector.load %arg7[%c0_15, %c0_16] : memref<1x128xf32, #tpu.memory_space<vmem>>, vector<1x128xf32>
    %21 = vector.broadcast %20 : vector<1x128xf32> to vector<8x128xf32>
    %22 = arith.addf %19, %21 : vector<8x128xf32>
    %cst_17 = arith.constant 5.000000e-01 : f32
    %23 = vector.broadcast %cst_17 : f32 to vector<8x128xf32>
    %24 = arith.mulf %23, %22 : vector<8x128xf32>
    %25 = math.tanh %24 : vector<8x128xf32>
    %cst_18 = arith.constant 5.000000e-01 : f32
    %26 = vector.broadcast %cst_18 : f32 to vector<8x128xf32>
    %27 = arith.mulf %26, %25 : vector<8x128xf32>
    %cst_19 = arith.constant 5.000000e-01 : f32
    %28 = vector.broadcast %cst_19 : f32 to vector<8x128xf32>
    %29 = arith.addf %27, %28 : vector<8x128xf32>
    %c0_20 = arith.constant 0 : index
    %c0_21 = arith.constant 0 : index
    %30 = vector.load %arg8[%c0_20, %c0_21] : memref<8x128xf32, #tpu.memory_space<vmem>>, vector<8x128xf32>
    tpu.vector_store %arg8[%c0_20, %c0_21], %29 {strides = array<i32>} : memref<8x128xf32, #tpu.memory_space<vmem>>, vector<8x128xf32>,
    return
  }
  func.func @transform_0(%arg0: i32) -> (i32, i32) {
    %c0_i32 = arith.constant 0 : i32
    %c0_i32_0 = arith.constant 0 : i32
    return %arg0, %c0_i32 : i32, i32
  }
  func.func @transform_1(%arg0: i32) -> (i32, i32) {
    %c0_i32 = arith.constant 0 : i32
    %c0_i32_0 = arith.constant 0 : i32
    %c0_i32_1 = arith.constant 0 : i32
    return %c0_i32, %c0_i32_0 : i32, i32
  }
  func.func @transform_2(%arg0: i32) -> (i32, i32) {
    %c0_i32 = arith.constant 0 : i32
    %c0_i32_0 = arith.constant 0 : i32
    %c0_i32_1 = arith.constant 0 : i32
    return %c0_i32, %c0_i32_0 : i32, i32
  }
  func.func @transform_3(%arg0: i32) -> (i32, i32) {
    %c0_i32 = arith.constant 0 : i32
    %c0_i32_0 = arith.constant 0 : i32
    %c0_i32_1 = arith.constant 0 : i32
    return %c0_i32, %c0_i32_0 : i32, i32
  }
  func.func @transform_4(%arg0: i32) -> (i32, i32) {
    %c0_i32 = arith.constant 0 : i32
    %c0_i32_0 = arith.constant 0 : i32
    %c0_i32_1 = arith.constant 0 : i32
    return %c0_i32, %c0_i32_0 : i32, i32
  }
  func.func @transform_5(%arg0: i32) -> (i32, i32) {
    %c0_i32 = arith.constant 0 : i32
    %c0_i32_0 = arith.constant 0 : i32
    %c0_i32_1 = arith.constant 0 : i32
    return %c0_i32, %c0_i32_0 : i32, i32
  }
  func.func @transform_6(%arg0: i32) -> (i32, i32) {
    %c0_i32 = arith.constant 0 : i32
    %c0_i32_0 = arith.constant 0 : i32
    %c0_i32_1 = arith.constant 0 : i32
    return %c0_i32, %c0_i32_0 : i32, i32
  }
  func.func @transform_7(%arg0: i32) -> (i32, i32) {
    %c0_i32 = arith.constant 0 : i32
    %c0_i32_0 = arith.constant 0 : i32
    return %arg0, %c0_i32 : i32, i32
  }
}

</mosaic_0001>

<llo_original>
// kernel: variance_confidence_nn.1
$region0: #{variance_confidence_nn.1}
  #allocation0 [shape = 'u32[]', space=smem, size = 0x4, offset = 0x4, fixed_abs, tag = 'smem constant byte address 0x4 - core index']
  #allocation1 [shape = 'u32[144,128]{1,0:T(1,128)}', space=vmem, size = 0x12000, scoped, tag = 'internal scratch']
  %s0 = inlined_call_operand.vmem [shape: f32[8,128], index: 0, kind: input, shape index: {}]
  %s1 = inlined_call_operand.hbm [shape: bf16[128,256], index: 1, kind: input, shape index: {}]
  %s2 = inlined_call_operand.vmem [shape: bf16[1,256], index: 2, kind: input, shape index: {}]
  %s3 = inlined_call_operand.hbm [shape: bf16[256,128], index: 3, kind: input, shape index: {}]
  %s4 = inlined_call_operand.vmem [shape: bf16[1,128], index: 4, kind: input, shape index: {}]
  %s5 = inlined_call_operand.vmem [shape: bf16[128,128], index: 5, kind: input, shape index: {}]
  %s6 = inlined_call_operand.vmem [shape: f32[1,128], index: 6, kind: input, shape index: {}]
  %s7 = inlined_call_operand.vmem [shape: f32[8,128], index: 7, kind: output, shape index: {}]
  %s8 = sld [smem:[#allocation0]]
  $region46: #{variance_confidence_nn.1} parent=0
    _
  %s10 = ssub.s32 1, %s8
  %s11 = scalar_select 0, %s10, %s8
  $region1: #{variance_confidence_nn.1} parent=0
    #allocation2 [shape = 'u8[65536]{0}', space=vmem, size = 0x10000, scoped, tag = 'input window, operand 1, single buffered']
    #allocation3 [shape = 's32[1]{0}', space=sflag, size = 0x4, scoped, tag = 'scoped memory for variance_confidence_nn.1']
    #allocation4 [shape = 'u8[65536]{0}', space=vmem, size = 0x10000, scoped, tag = 'input window, operand 3, single buffered']
    #allocation5 [shape = 's32[1]{0}', space=sflag, size = 0x4, scoped, tag = 'scoped memory for variance_confidence_nn.1']
    %12 = vsyncpa [#allocation3], 0
    %13 = vsyncpa [#allocation5], 0
    // Predicated region
    $region2: #{variance_confidence_nn.1} parent=1 // pred_check
      _
    $region3: #{variance_confidence_nn.1} parent=1 // pred_check_branch
      %15 = sbr.rel (0) target = $region5
    $region4: #{variance_confidence_nn.1} parent=1 // pred_region
      _
    $region5: #{variance_confidence_nn.1} parent=1 // pred_fallthru
      _
    // Predicated region
    $region6: #{variance_confidence_nn.1} parent=1 // pred_check
      _
    $region7: #{variance_confidence_nn.1} parent=1 // pred_check_branch
      %17 = sbr.rel (0) target = $region9
    $region8: #{variance_confidence_nn.1} parent=1 // pred_region
      %s19 = ssub.s32 2048, 2048
      %20 = vsyncadd [#allocation3], %s19
      %s21 = sshll.u32 [#allocation2], 4
      %s22 = int_to_ptr.vmem [resolvable:$true] %s21
      %27 = dma.hbm_to_vmem [thread:$0]  %s1, 2048, %s22, [#allocation3], 128, 128, 8
    $region9: #{variance_confidence_nn.1} parent=1 // pred_fallthru
      _
    // Predicated region
    $region10: #{variance_confidence_nn.1} parent=1 // pred_check
      _
    $region11: #{variance_confidence_nn.1} parent=1 // pred_check_branch
      %29 = sbr.rel (0) target = $region13
    $region12: #{variance_confidence_nn.1} parent=1 // pred_region
      _
    $region13: #{variance_confidence_nn.1} parent=1 // pred_fallthru
      _
    // Predicated region
    $region14: #{variance_confidence_nn.1} parent=1 // pred_check
      _
    $region15: #{variance_confidence_nn.1} parent=1 // pred_check_branch
      %31 = sbr.rel (0) target = $region17
    $region16: #{variance_confidence_nn.1} parent=1 // pred_region
      %s33 = ssub.s32 2048, 2048
      %34 = vsyncadd [#allocation5], %s33
      %s35 = sshll.u32 [#allocation4], 4
      %s36 = int_to_ptr.vmem [resolvable:$true] %s35
      %41 = dma.hbm_to_vmem [thread:$0]  %s3, 2048, %s36, [#allocation5], 64, 64, 4
    $region17: #{variance_confidence_nn.1} parent=1 // pred_fallthru
      _
    // Predicated region
    $region18: #{variance_confidence_nn.1} parent=1 // pred_check
      _
    $region19: #{variance_confidence_nn.1} parent=1 // pred_check_branch
      %43 = sbr.rel (0) target = $region21
    $region20: #{variance_confidence_nn.1} parent=1 // pred_region
      _
    $region21: #{variance_confidence_nn.1} parent=1 // pred_fallthru
      _
    // Predicated region
    $region22: #{variance_confidence_nn.1} parent=1 // pred_check
      _
    $region23: #{variance_confidence_nn.1} parent=1 // pred_check_branch
      %45 = sbr.rel (0) target = $region25
    $region24: #{variance_confidence_nn.1} parent=1 // pred_region
      _
    $region25: #{variance_confidence_nn.1} parent=1 // pred_fallthru
      _
    // Predicated region
    $region26: #{variance_confidence_nn.1} parent=1 // pred_check
      _
    $region27: #{variance_confidence_nn.1} parent=1 // pred_check_branch
      %47 = sbr.rel (0) target = $region29
    $region28: #{variance_confidence_nn.1} parent=1 // pred_region
      _
    $region29: #{variance_confidence_nn.1} parent=1 // pred_fallthru
      _
    // Predicated region
    $region30: #{variance_confidence_nn.1} parent=1 // pred_check
      _
    $region31: #{variance_confidence_nn.1} parent=1 // pred_check_branch
      %49 = sbr.rel (0) target = $region33
    $region32: #{variance_confidence_nn.1} parent=1 // pred_region
      %50 = dma.done [#allocation3], 2048
    $region33: #{variance_confidence_nn.1} parent=1 // pred_fallthru
      _
    // Predicated region
    $region34: #{variance_confidence_nn.1} parent=1 // pred_check
      _
    $region35: #{variance_confidence_nn.1} parent=1 // pred_check_branch
      %52 = sbr.rel (0) target = $region37
    $region36: #{variance_confidence_nn.1} parent=1 // pred_region
      %53 = dma.done [#allocation5], 2048
    $region37: #{variance_confidence_nn.1} parent=1 // pred_fallthru
      _
    %v55 = vld [vmem:[%s0] sm:$0xff]
    %v56 = vpack.c.bf16 %v55, %v55
    %v57 = vld [vmem:[#allocation2] sm:$0xff]
    %v58 = vld [vmem:[#allocation2 + $0x8] sm:$0xff]
    %v59 = vld [vmem:[#allocation2 + $0x10] sm:$0xff]
    %v60 = vld [vmem:[#allocation2 + $0x18] sm:$0xff]
    %v61 = vld [vmem:[#allocation2 + $0x20] sm:$0xff]
    %v62 = vld [vmem:[#allocation2 + $0x28] sm:$0xff]
    %v63 = vld [vmem:[#allocation2 + $0x30] sm:$0xff]
    %v64 = vld [vmem:[#allocation2 + $0x38] sm:$0xff]
    %v65 = vld [vmem:[#allocation2 + $0x40] sm:$0xff]
    %v66 = vld [vmem:[#allocation2 + $0x48] sm:$0xff]
    %v67 = vld [vmem:[#allocation2 + $0x50] sm:$0xff]
    %v68 = vld [vmem:[#allocation2 + $0x58] sm:$0xff]
    %v69 = vld [vmem:[#allocation2 + $0x60] sm:$0xff]
    %v70 = vld [vmem:[#allocation2 + $0x68] sm:$0xff]
    %v71 = vld [vmem:[#allocation2 + $0x70] sm:$0xff]
    %v72 = vld [vmem:[#allocation2 + $0x78] sm:$0xff]
    %v89 = vunpack.c.l.b16 %v57
    %v90 = vunpack.c.h.b16 %v57
    %v91 = vunpack.c.l.b16 %v58
    %v92 = vunpack.c.h.b16 %v58
    %v93 = vunpack.c.l.b16 %v59
    %v94 = vunpack.c.h.b16 %v59
    %v95 = vunpack.c.l.b16 %v60
    %v96 = vunpack.c.h.b16 %v60
    %v97 = vunpack.c.l.b16 %v61
    %v98 = vunpack.c.h.b16 %v61
    %v99 = vunpack.c.l.b16 %v62
    %v100 = vunpack.c.h.b16 %v62
    %v101 = vunpack.c.l.b16 %v63
    %v102 = vunpack.c.h.b16 %v63
    %v103 = vunpack.c.l.b16 %v64
    %v104 = vunpack.c.h.b16 %v64
    %v105 = vunpack.c.l.b16 %v65
    %v106 = vunpack.c.h.b16 %v65
    %v107 = vunpack.c.l.b16 %v66
    %v108 = vunpack.c.h.b16 %v66
    %v109 = vunpack.c.l.b16 %v67
    %v110 = vunpack.c.h.b16 %v67
    %v111 = vunpack.c.l.b16 %v68
    %v112 = vunpack.c.h.b16 %v68
    %v113 = vunpack.c.l.b16 %v69
    %v114 = vunpack.c.h.b16 %v69
    %v115 = vunpack.c.l.b16 %v70
    %v116 = vunpack.c.h.b16 %v70
    %v117 = vunpack.c.l.b16 %v71
    %v118 = vunpack.c.h.b16 %v71
    %v119 = vunpack.c.l.b16 %v72
    %v120 = vunpack.c.h.b16 %v72
    %v121 = vpack.c.b16 %v91, %v89
    %v122 = vpack.c.b16 %v92, %v90
    %v123 = vpack.c.b16 %v95, %v93
    %v124 = vpack.c.b16 %v96, %v94
    %v125 = vpack.c.b16 %v99, %v97
    %v126 = vpack.c.b16 %v100, %v98
    %v127 = vpack.c.b16 %v103, %v101
    %v128 = vpack.c.b16 %v104, %v102
    %v129 = vpack.c.b16 %v107, %v105
    %v130 = vpack.c.b16 %v108, %v106
    %v131 = vpack.c.b16 %v111, %v109
    %v132 = vpack.c.b16 %v112, %v110
    %v133 = vpack.c.b16 %v115, %v113
    %v134 = vpack.c.b16 %v116, %v114
    %v135 = vpack.c.b16 %v119, %v117
    %v136 = vpack.c.b16 %v120, %v118
    %153 = vmatprep.subr.bf16.mxu0 %v136
    %154 = vmatpush1.bf16.msra.mxu0 %v135
    %155 = vmatprep.subr.bf16.mxu0 %v134
    %156 = vmatpush1.bf16.msra.mxu0 %v133
    %157 = vmatprep.subr.bf16.mxu0 %v132
    %158 = vmatpush1.bf16.msra.mxu0 %v131
    %159 = vmatprep.subr.bf16.mxu0 %v130
    %160 = vmatpush1.bf16.msra.mxu0 %v129
    %161 = vmatprep.subr.bf16.mxu0 %v128
    %162 = vmatpush1.bf16.msra.mxu0 %v127
    %163 = vmatprep.subr.bf16.mxu0 %v126
    %164 = vmatpush1.bf16.msra.mxu0 %v125
    %165 = vmatprep.subr.bf16.mxu0 %v124
    %166 = vmatpush1.bf16.msra.mxu0 %v123
    %167 = vmatprep.subr.bf16.mxu0 %v122
    %168 = vmatpush1.bf16.msra.mxu0 %v121
    %169 = vmatprep.subr.bf16.mxu0 0
    %170 = vmatpush2.bf16.msra.mxu0 0
    %171 = vmatprep.subr.bf16.mxu0 0
    %172 = vmatpush2.bf16.msra.mxu0 0
    %173 = vmatprep.subr.bf16.mxu0 0
    %174 = vmatpush2.bf16.msra.mxu0 0
    %175 = vmatprep.subr.bf16.mxu0 0
    %176 = vmatpush2.bf16.msra.mxu0 0
    %177 = vmatprep.subr.bf16.mxu0 0
    %178 = vmatpush2.bf16.msra.mxu0 0
    %179 = vmatprep.subr.bf16.mxu0 0
    %180 = vmatpush2.bf16.msra.mxu0 0
    %181 = vmatprep.subr.bf16.mxu0 0
    %182 = vmatpush2.bf16.msra.mxu0 0
    %183 = vmatprep.subr.bf16.mxu0 0
    %184 = vmatpush2.bf16.msra.mxu0 0
    %185 = vmatprep.mubr.bf16.mxu0 0
    %186 = vmatmul.mubr.bf16.gmra.mxu0 %v56
    %v187 = vpop.f32.mrf.mxu0
    %v188 = vadd.f32 0.0, %v187
    %v189 = vpop.f32.mrf.mxu0
    %v190 = vadd.f32 0.0, %v189
    %v191 = vpop.f32.mrf.mxu0
    %v192 = vpop.f32.mrf.mxu0
    %193 = vdwg.mxu0
    %v194 = vpack.c.bf16 %v188, %v188
    %v195 = vpack.c.bf16 %v190, %v190
    %v196 = vld [vmem:[%s2] sm:$0x3]
    %v199 = vunpack.c.l.s4 1966171168
    %v200 = vunpack.c.0.s8 %v199
    %v201 = vlaneseq
    %v202 = vshrl.u32 %v201, 7
    %v203 = vsub.s32 %v200, %v202
    %v204 = vrot.slane %v196, %v203
    %v205 = vcombine.high %v204, %v204
    %v207 = vunpack.c.l.s4 1966171168
    %v208 = vunpack.c.0.s8 %v207
    %v209 = vlaneseq
    %v210 = vshrl.u32 %v209, 7
    %v211 = vsub.s32 %v208, %v210
    %v212 = vrot.slane %v204, %v211
    %v214 = vunpack.c.l.s4 1966171168
    %v215 = vunpack.c.0.s8 %v214
    %v216 = vlaneseq
    %v217 = vshrl.u32 %v216, 7
    %v218 = vsub.s32 %v215, %v217
    %v219 = vrot.slane %v205, %v218
    %v221 = vpack.i.b16 %v212, %v212
    %v223 = vlaneseq
    %v224 = vshrl.u32 %v223, 7
    %v225 = vsub.s32 0, %v224
    %v226 = vrot.slane %v221, %v225
    %v228 = vpack.i.b16 %v219, %v219
    %v230 = vlaneseq
    %v231 = vshrl.u32 %v230, 7
    %v232 = vsub.s32 0, %v231
    %v233 = vrot.slane %v228, %v232
    %v234 = vadd.bf16 %v194, %v226
    %v235 = vadd.bf16 %v195, %v233
    %v236 = vmax.bf16 %v234, 0
    %v237 = vmax.bf16 %v235, 0
    %v238 = vld [vmem:[#allocation4] sm:$0xf]
    %v239 = vld [vmem:[#allocation4 + $0x4] sm:$0xf]
    %v240 = vld [vmem:[#allocation4 + $0x8] sm:$0xf]
    %v241 = vld [vmem:[#allocation4 + $0xc] sm:$0xf]
    %v242 = vld [vmem:[#allocation4 + $0x10] sm:$0xf]
    %v243 = vld [vmem:[#allocation4 + $0x14] sm:$0xf]
    %v244 = vld [vmem:[#allocation4 + $0x18] sm:$0xf]
    %v245 = vld [vmem:[#allocation4 + $0x1c] sm:$0xf]
    %v246 = vld [vmem:[#allocation4 + $0x20] sm:$0xf]
    %v247 = vld [vmem:[#allocation4 + $0x24] sm:$0xf]
    %v248 = vld [vmem:[#allocation4 + $0x28] sm:$0xf]
    %v249 = vld [vmem:[#allocation4 + $0x2c] sm:$0xf]
    %v250 = vld [vmem:[#allocation4 + $0x30] sm:$0xf]
    %v251 = vld [vmem:[#allocation4 + $0x34] sm:$0xf]
    %v252 = vld [vmem:[#allocation4 + $0x38] sm:$0xf]
    %v253 = vld [vmem:[#allocation4 + $0x3c] sm:$0xf]
    %v254 = vld [vmem:[#allocation4 + $0x40] sm:$0xf]
    %v255 = vld [vmem:[#allocation4 + $0x44] sm:$0xf]
    %v256 = vld [vmem:[#allocation4 + $0x48] sm:$0xf]
    %v257 = vld [vmem:[#allocation4 + $0x4c] sm:$0xf]
    %v258 = vld [vmem:[#allocation4 + $0x50] sm:$0xf]
    %v259 = vld [vmem:[#allocation4 + $0x54] sm:$0xf]
    %v260 = vld [vmem:[#allocation4 + $0x58] sm:$0xf]
    %v261 = vld [vmem:[#allocation4 + $0x5c] sm:$0xf]
    %v262 = vld [vmem:[#allocation4 + $0x60] sm:$0xf]
    %v263 = vld [vmem:[#allocation4 + $0x64] sm:$0xf]
    %v264 = vld [vmem:[#allocation4 + $0x68] sm:$0xf]
    %v265 = vld [vmem:[#allocation4 + $0x6c] sm:$0xf]
    %v266 = vld [vmem:[#allocation4 + $0x70] sm:$0xf]
    %v267 = vld [vmem:[#allocation4 + $0x74] sm:$0xf]
    %v268 = vld [vmem:[#allocation4 + $0x78] sm:$0xf]
    %v269 = vld [vmem:[#allocation4 + $0x7c] sm:$0xf]
    %v302 = vunpack.c.l.b16 %v238
    %v303 = vunpack.c.l.b16 %v239
    %v304 = vunpack.c.l.b16 %v240
    %v305 = vunpack.c.l.b16 %v241
    %v306 = vunpack.c.l.b16 %v242
    %v307 = vunpack.c.l.b16 %v243
    %v308 = vunpack.c.l.b16 %v244
    %v309 = vunpack.c.l.b16 %v245
    %v310 = vunpack.c.l.b16 %v246
    %v311 = vunpack.c.l.b16 %v247
    %v312 = vunpack.c.l.b16 %v248
    %v313 = vunpack.c.l.b16 %v249
    %v314 = vunpack.c.l.b16 %v250
    %v315 = vunpack.c.l.b16 %v251
    %v316 = vunpack.c.l.b16 %v252
    %v317 = vunpack.c.l.b16 %v253
    %v318 = vunpack.c.l.b16 %v254
    %v319 = vunpack.c.l.b16 %v255
    %v320 = vunpack.c.l.b16 %v256
    %v321 = vunpack.c.l.b16 %v257
    %v322 = vunpack.c.l.b16 %v258
    %v323 = vunpack.c.l.b16 %v259
    %v324 = vunpack.c.l.b16 %v260
    %v325 = vunpack.c.l.b16 %v261
    %v326 = vunpack.c.l.b16 %v262
    %v327 = vunpack.c.l.b16 %v263
    %v328 = vunpack.c.l.b16 %v264
    %v329 = vunpack.c.l.b16 %v265
    %v330 = vunpack.c.l.b16 %v266
    %v331 = vunpack.c.l.b16 %v267
    %v332 = vunpack.c.l.b16 %v268
    %v333 = vunpack.c.l.b16 %v269
    %v334 = vpack.c.b16 %v303, %v302
    %v335 = vpack.c.b16 %v305, %v304
    %v336 = vpack.c.b16 %v307, %v306
    %v337 = vpack.c.b16 %v309, %v308
    %v338 = vpack.c.b16 %v311, %v310
    %v339 = vpack.c.b16 %v313, %v312
    %v340 = vpack.c.b16 %v315, %v314
    %v341 = vpack.c.b16 %v317, %v316
    %v342 = vpack.c.b16 %v319, %v318
    %v343 = vpack.c.b16 %v321, %v320
    %v344 = vpack.c.b16 %v323, %v322
    %v345 = vpack.c.b16 %v325, %v324
    %v346 = vpack.c.b16 %v327, %v326
    %v347 = vpack.c.b16 %v329, %v328
    %v348 = vpack.c.b16 %v331, %v330
    %v349 = vpack.c.b16 %v333, %v332
    %366 = vmatprep.subr.bf16.mxu0 0
    %367 = vmatpush1.bf16.msra.mxu0 %v341
    %368 = vmatprep.subr.bf16.mxu0 0
    %369 = vmatpush1.bf16.msra.mxu0 %v340
    %370 = vmatprep.subr.bf16.mxu0 0
    %371 = vmatpush1.bf16.msra.mxu0 %v339
    %372 = vmatprep.subr.bf16.mxu0 0
    %373 = vmatpush1.bf16.msra.mxu0 %v338
    %374 = vmatprep.subr.bf16.mxu0 0
    %375 = vmatpush1.bf16.msra.mxu0 %v337
    %376 = vmatprep.subr.bf16.mxu0 0
    %377 = vmatpush1.bf16.msra.mxu0 %v336
    %378 = vmatprep.subr.bf16.mxu0 0
    %379 = vmatpush1.bf16.msra.mxu0 %v335
    %380 = vmatprep.subr.bf16.mxu0 0
    %381 = vmatpush1.bf16.msra.mxu0 %v334
    %382 = vmatprep.subr.bf16.mxu0 0
    %383 = vmatpush2.bf16.msra.mxu0 %v349
    %384 = vmatprep.subr.bf16.mxu0 0
    %385 = vmatpush2.bf16.msra.mxu0 %v348
    %386 = vmatprep.subr.bf16.mxu0 0
    %387 = vmatpush2.bf16.msra.mxu0 %v347
    %388 = vmatprep.subr.bf16.mxu0 0
    %389 = vmatpush2.bf16.msra.mxu0 %v346
    %390 = vmatprep.subr.bf16.mxu0 0
    %391 = vmatpush2.bf16.msra.mxu0 %v345
    %392 = vmatprep.subr.bf16.mxu0 0
    %393 = vmatpush2.bf16.msra.mxu0 %v344
    %394 = vmatprep.subr.bf16.mxu0 0
    %395 = vmatpush2.bf16.msra.mxu0 %v343
    %396 = vmatprep.subr.bf16.mxu0 0
    %397 = vmatpush2.bf16.msra.mxu0 %v342
    %398 = vmatprep.mubr.bf16.mxu0 %v237
    %399 = vmatmul.mubr.bf16.gmra.mxu0 %v236
    %v400 = vpop.f32.mrf.mxu0
    %v401 = vadd.f32 0.0, %v400
    %v402 = vpop.f32.mrf.mxu0
    %v403 = vpop.f32.mrf.mxu0
    %v404 = vpop.f32.mrf.mxu0
    %405 = vdwg.mxu0
    %v406 = vpack.c.bf16 %v401, %v401
    %v407 = vld [vmem:[%s4] sm:$0x1]
    %v409 = vpack.i.b16 %v407, %v407
    %v411 = vlaneseq
    %v412 = vshrl.u32 %v411, 7
    %v413 = vsub.s32 0, %v412
    %v414 = vrot.slane %v409, %v413
    %v415 = vadd.bf16 %v406, %v414
    %v416 = vmax.bf16 %v415, 0
    %v417 = vld [vmem:[%s5] sm:$0xf]
    %v418 = vld [vmem:[%s5 + $0x4] sm:$0xf]
    %v419 = vld [vmem:[%s5 + $0x8] sm:$0xf]
    %v420 = vld [vmem:[%s5 + $0xc] sm:$0xf]
    %v421 = vld [vmem:[%s5 + $0x10] sm:$0xf]
    %v422 = vld [vmem:[%s5 + $0x14] sm:$0xf]
    %v423 = vld [vmem:[%s5 + $0x18] sm:$0xf]
    %v424 = vld [vmem:[%s5 + $0x1c] sm:$0xf]
    %v425 = vld [vmem:[%s5 + $0x20] sm:$0xf]
    %v426 = vld [vmem:[%s5 + $0x24] sm:$0xf]
    %v427 = vld [vmem:[%s5 + $0x28] sm:$0xf]
    %v428 = vld [vmem:[%s5 + $0x2c] sm:$0xf]
    %v429 = vld [vmem:[%s5 + $0x30] sm:$0xf]
    %v430 = vld [vmem:[%s5 + $0x34] sm:$0xf]
    %v431 = vld [vmem:[%s5 + $0x38] sm:$0xf]
    %v432 = vld [vmem:[%s5 + $0x3c] sm:$0xf]
    %v433 = vld [vmem:[%s6] sm:$0x1]
    %v435 = vlaneseq
    %v436 = vshrl.u32 %v435, 7
    %v437 = vsub.s32 0, %v436
    %v438 = vrot.slane %v433, %v437
    %v456 = vunpack.c.l.b16 %v417
    %v457 = vunpack.c.l.b16 %v418
    %v458 = vunpack.c.l.b16 %v419
    %v459 = vunpack.c.l.b16 %v420
    %v460 = vunpack.c.l.b16 %v421
    %v461 = vunpack.c.l.b16 %v422
    %v462 = vunpack.c.l.b16 %v423
    %v463 = vunpack.c.l.b16 %v424
    %v464 = vunpack.c.l.b16 %v425
    %v465 = vunpack.c.l.b16 %v426
    %v466 = vunpack.c.l.b16 %v427
    %v467 = vunpack.c.l.b16 %v428
    %v468 = vunpack.c.l.b16 %v429
    %v469 = vunpack.c.l.b16 %v430
    %v470 = vunpack.c.l.b16 %v431
    %v471 = vunpack.c.l.b16 %v432
    %v472 = vpack.c.b16 %v457, %v456
    %v473 = vpack.c.b16 %v459, %v458
    %v474 = vpack.c.b16 %v461, %v460
    %v475 = vpack.c.b16 %v463, %v462
    %v476 = vpack.c.b16 %v465, %v464
    %v477 = vpack.c.b16 %v467, %v466
    %v478 = vpack.c.b16 %v469, %v468
    %v479 = vpack.c.b16 %v471, %v470
    %488 = vmatprep.subr.bf16.mxu0 0
    %489 = vmatpush1.bf16.msra.mxu0 %v479
    %490 = vmatprep.subr.bf16.mxu0 0
    %491 = vmatpush1.bf16.msra.mxu0 %v478
    %492 = vmatprep.subr.bf16.mxu0 0
    %493 = vmatpush1.bf16.msra.mxu0 %v477
    %494 = vmatprep.subr.bf16.mxu0 0
    %495 = vmatpush1.bf16.msra.mxu0 %v476
    %496 = vmatprep.subr.bf16.mxu0 0
    %497 = vmatpush1.bf16.msra.mxu0 %v475
    %498 = vmatprep.subr.bf16.mxu0 0
    %499 = vmatpush1.bf16.msra.mxu0 %v474
    %500 = vmatprep.subr.bf16.mxu0 0
    %501 = vmatpush1.bf16.msra.mxu0 %v473
    %502 = vmatprep.subr.bf16.mxu0 0
    %503 = vmatpush1.bf16.msra.mxu0 %v472
    %504 = vmatprep.subr.bf16.mxu0 0
    %505 = vmatpush2.bf16.msra.mxu0 0
    %506 = vmatprep.subr.bf16.mxu0 0
    %507 = vmatpush2.bf16.msra.mxu0 0
    %508 = vmatprep.subr.bf16.mxu0 0
    %509 = vmatpush2.bf16.msra.mxu0 0
    %510 = vmatprep.subr.bf16.mxu0 0
    %511 = vmatpush2.bf16.msra.mxu0 0
    %512 = vmatprep.subr.bf16.mxu0 0
    %513 = vmatpush2.bf16.msra.mxu0 0
    %514 = vmatprep.subr.bf16.mxu0 0
    %515 = vmatpush2.bf16.msra.mxu0 0
    %516 = vmatprep.subr.bf16.mxu0 0
    %517 = vmatpush2.bf16.msra.mxu0 0
    %518 = vmatprep.subr.bf16.mxu0 0
    %519 = vmatpush2.bf16.msra.mxu0 0
    %520 = vmatprep.mubr.bf16.mxu0 0
    %521 = vmatmul.mubr.bf16.gmra.mxu0 %v416
    %v522 = vpop.f32.mrf.mxu0
    %v523 = vadd.f32 %v438, %v522
    %v524 = vpop.f32.mrf.mxu0
    %v525 = vpop.f32.mrf.mxu0
    %v526 = vpop.f32.mrf.mxu0
    %527 = vdwg.mxu0
    %v528 = vmul.f32 %v523, 0.5
    %v529 = vtanh.pop %v528
    %v530 = vmul.f32 %v529, 0.5
    %v531 = vadd.f32 %v530, 0.5
    %532 = vst [vmem:[%s7] sm:$0xff] %v531
    // Predicated region
    $region38: #{variance_confidence_nn.1} parent=1 // pred_check
      _
    $region39: #{variance_confidence_nn.1} parent=1 // pred_check_branch
      %534 = sbr.rel (0) target = $region41
    $region40: #{variance_confidence_nn.1} parent=1 // pred_region
      _
    $region41: #{variance_confidence_nn.1} parent=1 // pred_fallthru
      _
    // Predicated region
    $region42: #{variance_confidence_nn.1} parent=1 // pred_check
      _
    $region43: #{variance_confidence_nn.1} parent=1 // pred_check_branch
      %536 = sbr.rel (0) target = $region45
    $region44: #{variance_confidence_nn.1} parent=1 // pred_region
      _
    $region45: #{variance_confidence_nn.1} parent=1 // pred_fallthru
      _
    %537 = vsyncpa [#allocation3], 1
    %538 = vsyncpa [#allocation5], 1

</llo_original>
